<compile_context>
chip_gen: v7x
topology: tpu7x:2x2x1
jax: 0.10.0
libtpu: 0.0.40
codegen_flags: <defaults>
</compile_context>

<pallas_src>
import functools

import numpy as np
import jax
import jax.numpy as jnp
from jax import lax
from jax.experimental import pallas as pl
from jax.experimental.pallas import tpu as pltpu

LTIMES = 8
TEMPERATURE = 0.01


# ----------------------------------------------------------------------------
# Residual bit-tree quantization (mirrors Module.quant, update_partition=True).
# ----------------------------------------------------------------------------
def residual_quant(W, thres, repeat_factor, *, max_bw_pow=2,
                   res_denos=(3.0, 5.0, 17.0, 257.0, 65537.0),
                   rbf_mu=(0.0, 1.0, 2.0, 3.0), rbf_sigma=0.6,
                   eps=1e-16, clamp_values=(2.0, 8.0), temp=TEMPERATURE):
    N, D = W.shape
    mu = jnp.asarray(rbf_mu, W.dtype)

    beta = jnp.max(W)
    alpha = jnp.min(W)
    s = (beta - alpha) / res_denos[0]
    total = s * jnp.round(W / s)                      # first residual level

    for idx in range(1, max_bw_pow):
        s = s / res_denos[idx]
        res_err = W - total                            # (N, D)
        idx_maps = jnp.argsort(res_err, axis=0)        # (N, D)
        sorted_err = jnp.take_along_axis(res_err, idx_maps, axis=0)
        transfer = jax.nn.one_hot(idx_maps, N, dtype=W.dtype)      # (N, D, N)

        delta = sorted_err[1:] - sorted_err[:-1]       # (N-1, D)
        # Guard max(delta)==0 (all residuals equal in every column) -> avoids 0/0 NaN.
        delta = delta / jnp.maximum(jnp.max(delta), jnp.asarray(eps, W.dtype))
        sig_t = jnp.repeat(jax.nn.sigmoid(thres[idx - 1]), repeat_factor)  # (D,)
        mean_split = jax.nn.sigmoid((delta - sig_t[None, :]) / temp)       # df_lt
        round_split = jnp.concatenate(
            [jnp.zeros((1, D), W.dtype), mean_split], axis=0)              # (N, D)

        cum = jnp.cumsum(round_split, axis=0)[:, :, None]                  # (N, D, 1)
        # rbf_wmeans: exp(-|x - mu + eps| / (2*sigma^2)); eps inside the abs matches
        # the PyTorch reference (x - means + eps).pow(2).pow(0.5).
        clustering = jnp.round(
            jnp.exp(-jnp.abs(cum - mu[None, None, :] + eps) / (2.0 * rbf_sigma ** 2)))

        grp_mean = (sorted_err[:, :, None] * clustering).sum(axis=0) / (
            clustering.sum(axis=0) + eps)                                   # (D, 4)
        inner_grouped = jnp.einsum('ndc,dc->nd', clustering, grp_mean)      # (N, D)
        grouped = jnp.einsum('cd,cda->ad', inner_grouped, transfer)         # unsort

        bits = jnp.clip(jnp.round(grouped / s),
                        -clamp_values[idx - 1], clamp_values[idx - 1])
        total = total + s * bits
    return total


# ----------------------------------------------------------------------------
# Pallas kernel: one grid step per ensemble group, full batch in the block.
#   1) im2col slab (B*Ho*Wo, ks*ks*Cin) written once into VMEM scratch
#   2) ONE bf16 MXU matmul against the pre-built per-group weight
#   3) lane-dense (Cout, B*Ho*Wo) store
# ----------------------------------------------------------------------------
def _group_conv_kernel(x_ref, wt_ref, o_ref, slab_ref, *, ks, Ho, Wo, dilation):
    # x_ref:    (B, Hp, Wp, Cin)      f32  padded channels-last input of this group
    # wt_ref:   (Cout, ks*ks*Cin)     bf16 dense per-group weight (KV already contracted)
    # o_ref:    (Cout, B*Ho*Wo)       f32  lane-dense output block
    # slab_ref: (B*Ho*Wo, ks*ks*Cin)  f32  VMEM im2col scratch
    B, Hp, Wp, Cin = x_ref.shape
    d = dilation

    # Build the im2col slab: one shifted window read per tap, paid once.
    for kh in range(ks):
        for kw in range(ks):
            p = kh * ks + kw
            patch = x_ref[:, kh * d:kh * d + Ho, kw * d:kw * d + Wo, :]  # (B,Ho,Wo,Cin)
            slab_ref[:, p * Cin:(p + 1) * Cin] = patch.reshape(B * Ho * Wo, Cin)

    # Single matmul: (Cout, K) x (M, K) contracted on K -> (Cout, M).
    # bf16 operands, f32 accumulation.
    slab = slab_ref[...].astype(jnp.bfloat16)
    acc = lax.dot_general(wt_ref[...], slab, (((1,), (1,)), ((), ())),
                          preferred_element_type=jnp.float32)
    o_ref[...] = acc.astype(o_ref.dtype)


def ensemble_group_conv(x5, wt, *, ks, Ho, Wo, dilation):
    """x5: (N, B, Hp, Wp, Cin) f32, wt: (N, Cout, ks*ks*Cin) bf16.
    Returns (N, Cout, B*Ho*Wo) f32."""
    N, B, Hp, Wp, Cin = x5.shape
    _, Cout, K = wt.shape
    BHW = B * Ho * Wo
    kernel = functools.partial(_group_conv_kernel, ks=ks, Ho=Ho, Wo=Wo,
                               dilation=dilation)
    return pl.pallas_call(
        kernel,
        out_shape=jax.ShapeDtypeStruct((N, Cout, BHW), jnp.float32),
        grid_spec=pltpu.PrefetchScalarGridSpec(
            num_scalar_prefetch=0,
            grid=(N,),
            in_specs=[
                pl.BlockSpec((None, B, Hp, Wp, Cin), lambda g: (g, 0, 0, 0, 0)),
                pl.BlockSpec((None, Cout, K), lambda g: (g, 0, 0)),
            ],
            out_specs=pl.BlockSpec((None, Cout, BHW), lambda g: (g, 0, 0)),
            scratch_shapes=[pltpu.VMEM((BHW, K), jnp.float32)],
        ),
        compiler_params=pltpu.CompilerParams(
            dimension_semantics=("parallel",)),   # v7x megacore: 3/2 split for N=5
    )(x5, wt)


# ----------------------------------------------------------------------------
# Module wrapper (deterministic parameter init, forward = quant + Pallas conv)
# ----------------------------------------------------------------------------
class Conv2dResBitTreeKVGNBAEns:
    def __init__(self, in_channels, out_channels, kernel_size, stride=1, padding=0,
                 dilation=1, groups=1, bias=False, N=5, bw=2, first=False,
                 key=jax.random.PRNGKey(0)):
        self.N, self.Cin, self.Cout, self.ks = N, in_channels, out_channels, kernel_size
        self.stride, self.padding, self.dilation = stride, padding, dilation
        self.use_bias = bias
        self.bw = bw
        self.k = 3 if first else max(out_channels, in_channels) // LTIMES

        kK, kV, kB = jax.random.split(key, 3)
        dK = out_channels * kernel_size * kernel_size * self.k
        dV = in_channels * kernel_size * kernel_size * self.k
        # kaiming_normal_ on a 2-D (N, D) tensor: std = sqrt(2 / fan_in), fan_in = D
        self.K = jax.random.normal(kK, (N, dK), jnp.float32) * np.sqrt(2.0 / dK)
        self.V = jax.random.normal(kV, (N, dV), jnp.float32) * np.sqrt(2.0 / dV)
        self.thres_K = jnp.full((bw - 1, out_channels), -1.3, jnp.float32)
        self.thres_V = jnp.full((bw - 1, in_channels), -1.3, jnp.float32)
        if bias:
            self.bias = (jax.random.normal(kB, (N, out_channels), jnp.float32)
                         * np.sqrt(2.0 / out_channels))
            self.thres_B = jnp.full((bw - 1, out_channels), -1.3, jnp.float32)
        # TODO(synk): npartitions / transfer_matrix / split_point caching
        # (update_partition=False path) is training-time Python bookkeeping; only
        # the update_partition=True forward path is implemented.

    def __call__(self, x):
        assert self.stride == 1, "TODO(synk): stride>1 not implemented in Pallas kernel"
        N, Cin, Cout, ks, k = self.N, self.Cin, self.Cout, self.ks, self.k
        rep = ks * ks * k

        qK = residual_quant(self.K, self.thres_K, rep, max_bw_pow=self.bw
                            ).reshape(N, Cout, ks, ks, k)
        qV = residual_quant(self.V, self.thres_V, rep, max_bw_pow=self.bw
                            ).reshape(N, Cin, ks, ks, k)
        # KV low-rank contraction hoisted out of the kernel (tiny tensor).
        # Column order (kh, kw, i) matches the im2col slab column order.
        wt = jnp.einsum('nopqk,nipqk->nopqi', qK, qV,
                        precision=lax.Precision.HIGHEST)
        wt = wt.reshape(N, Cout, ks * ks * Cin).astype(jnp.bfloat16)

        B, C, H, W = x.shape
        assert C == N * Cin
        p = self.padding
        xp = jnp.pad(x, ((0, 0), (0, 0), (p, p), (p, p)))
        Hp, Wp = H + 2 * p, W + 2 * p
        Ho = (Hp - self.dilation * (ks - 1) - 1) // self.stride + 1
        Wo = (Wp - self.dilation * (ks - 1) - 1) // self.stride + 1

        # NCHW -> (N, B, Hp, Wp, Cin): one small activation relayout in the wrapper.
        # TODO(synk): in a full network, keep activations channels-last end-to-end so
        # this relayout (and the output one below) disappears from the graph.
        x5 = xp.reshape(B, N, Cin, Hp, Wp).transpose(1, 0, 3, 4, 2)

        out = ensemble_group_conv(x5, wt, ks=ks, Ho=Ho, Wo=Wo,
                                  dilation=self.dilation)     # (N, Cout, B*Ho*Wo)
        out = out.reshape(N, Cout, B, Ho, Wo).transpose(2, 0, 1, 3, 4)
        out = out.reshape(B, N * Cout, Ho, Wo)
        if self.use_bias:
            qb = residual_quant(self.bias, self.thres_B, 1, max_bw_pow=self.bw)
            out = out + qb.reshape(1, N * Cout, 1, 1)
        return out


# ----------------------------------------------------------------------------
# Pure-JAX reference of the same forward (for correctness checking)
# ----------------------------------------------------------------------------
def reference_forward(mod, x):
    N, Cin, Cout, ks, k = mod.N, mod.Cin, mod.Cout, mod.ks, mod.k
    rep = ks * ks * k
    qK = residual_quant(mod.K, mod.thres_K, rep, max_bw_pow=mod.bw
                        ).reshape(N, Cout, ks, ks, k)
    qV = residual_quant(mod.V, mod.thres_V, rep, max_bw_pow=mod.bw
                        ).reshape(N, Cin, ks, ks, k)
    w = jnp.einsum('nopqk,nipqk->noipq', qK, qV, precision=lax.Precision.HIGHEST)
    w = w.reshape(N * Cout, Cin, ks, ks)
    out = lax.conv_general_dilated(
        x, w, window_strides=(mod.stride, mod.stride),
        padding=[(mod.padding, mod.padding)] * 2,
        rhs_dilation=(mod.dilation, mod.dilation),
        dimension_numbers=('NCHW', 'OIHW', 'NCHW'),
        feature_group_count=N, precision=lax.Precision.HIGHEST)
    if mod.use_bias:
        qb = residual_quant(mod.bias, mod.thres_B, 1, max_bw_pow=mod.bw)
        out = out + qb.reshape(1, N * Cout, 1, 1)
    return out


if __name__ == "__main__":
    key = jax.random.PRNGKey(0)
    kmod, kx = jax.random.split(key)

    N, Cin, Cout, ks = 5, 16, 16, 3          # k = max(16,16)//LTIMES = 2
    mod = Conv2dResBitTreeKVGNBAEns(Cin, Cout, ks, stride=1, padding=1, dilation=1,
                                    bias=False, N=N, bw=2, first=False, key=kmod)
    x = jax.random.normal(kx, (2, N * Cin, 8, 8), jnp.float32)   # (B, N*Cin, H, W)

    out = jax.block_until_ready(mod(x))
    ref = jax.block_until_ready(reference_forward(mod, x))

    assert out.shape == (2, N * Cout, 8, 8), out.shape
    assert np.isfinite(np.asarray(out)).all()
    # Kernel feeds the MXU with bf16 operands (f32 accumulation); compare against the
    # f32 HIGHEST-precision lax.conv reference with a bf16-appropriate tolerance.
    np.testing.assert_allclose(np.asarray(out), np.asarray(ref), rtol=2e-2, atol=1e-2)
    print("KERNEL_OK")
</pallas_src>

<mosaic_0001>
module attributes {stable_mosaic.version = 11 : i64} {
  func.func @_group_conv_kernel(%arg0: i32, %arg1: memref<1x2x10x10x16xf32, #tpu.memory_space<vmem>>, %arg2: memref<1x16x144xbf16, #tpu.memory_space<vmem>>, %arg3: memref<1x16x128xf32, #tpu.memory_space<vmem>>, %arg4: memref<128x144xf32, #tpu.memory_space<vmem>>) attributes {dimension_semantics = [#tpu.dimension_semantics<parallel>], iteration_bounds = array<i64: 5>, scalar_prefetch = 0 : i64, scratch_operands = 1 : i64, tpu.core_type = #tpu.core_type<tc>, window_params = [{transform_indices = @transform_0, window_bounds = array<i64: 1, 2, 10, 10, 16>}, {transform_indices = @transform_1, window_bounds = array<i64: 1, 16, 144>}, {transform_indices = @transform_2, window_bounds = array<i64: 1, 16, 128>}]} {
    %c0 = arith.constant 0 : index
    %c0_0 = arith.constant 0 : index
    %c0_1 = arith.constant 0 : index
    %c0_2 = arith.constant 0 : index
    %c0_3 = arith.constant 0 : index
    %0 = vector.load %arg1[%c0, %c0_0, %c0_1, %c0_2, %c0_3] : memref<1x2x10x10x16xf32, #tpu.memory_space<vmem>>, vector<1x2x8x8x16xf32>
    %1 = vector.shape_cast %0 : vector<1x2x8x8x16xf32> to vector<2x8x8x16xf32>
    %2 = vector.shape_cast %1 : vector<2x8x8x16xf32> to vector<128x16xf32>
    %c0_4 = arith.constant 0 : index
    %c0_5 = arith.constant 0 : index
    %3 = vector.load %arg4[%c0_4, %c0_5] : memref<128x144xf32, #tpu.memory_space<vmem>>, vector<128x16xf32>
    tpu.vector_store %arg4[%c0_4, %c0_5], %2 {strides = array<i32>} : memref<128x144xf32, #tpu.memory_space<vmem>>, vector<128x16xf32>,
    %c0_6 = arith.constant 0 : index
    %c0_7 = arith.constant 0 : index
    %c0_8 = arith.constant 0 : index
    %c1 = arith.constant 1 : index
    %c0_9 = arith.constant 0 : index
    %4 = vector.load %arg1[%c0_6, %c0_7, %c0_8, %c1, %c0_9] : memref<1x2x10x10x16xf32, #tpu.memory_space<vmem>>, vector<1x2x8x8x16xf32>
    %5 = vector.shape_cast %4 : vector<1x2x8x8x16xf32> to vector<2x8x8x16xf32>
    %6 = vector.shape_cast %5 : vector<2x8x8x16xf32> to vector<128x16xf32>
    %c0_10 = arith.constant 0 : index
    %c16 = arith.constant 16 : index
    %7 = vector.load %arg4[%c0_10, %c16] : memref<128x144xf32, #tpu.memory_space<vmem>>, vector<128x16xf32>
    tpu.vector_store %arg4[%c0_10, %c16], %6 {strides = array<i32>} : memref<128x144xf32, #tpu.memory_space<vmem>>, vector<128x16xf32>,
    %c0_11 = arith.constant 0 : index
    %c0_12 = arith.constant 0 : index
    %c0_13 = arith.constant 0 : index
    %c2 = arith.constant 2 : index
    %c0_14 = arith.constant 0 : index
    %8 = vector.load %arg1[%c0_11, %c0_12, %c0_13, %c2, %c0_14] : memref<1x2x10x10x16xf32, #tpu.memory_space<vmem>>, vector<1x2x8x8x16xf32>
    %9 = vector.shape_cast %8 : vector<1x2x8x8x16xf32> to vector<2x8x8x16xf32>
    %10 = vector.shape_cast %9 : vector<2x8x8x16xf32> to vector<128x16xf32>
    %c0_15 = arith.constant 0 : index
    %c32 = arith.constant 32 : index
    %11 = vector.load %arg4[%c0_15, %c32] : memref<128x144xf32, #tpu.memory_space<vmem>>, vector<128x16xf32>
    tpu.vector_store %arg4[%c0_15, %c32], %10 {strides = array<i32>} : memref<128x144xf32, #tpu.memory_space<vmem>>, vector<128x16xf32>,
    %c0_16 = arith.constant 0 : index
    %c0_17 = arith.constant 0 : index
    %c1_18 = arith.constant 1 : index
    %c0_19 = arith.constant 0 : index
    %c0_20 = arith.constant 0 : index
    %12 = vector.load %arg1[%c0_16, %c0_17, %c1_18, %c0_19, %c0_20] : memref<1x2x10x10x16xf32, #tpu.memory_space<vmem>>, vector<1x2x8x8x16xf32>
    %13 = vector.shape_cast %12 : vector<1x2x8x8x16xf32> to vector<2x8x8x16xf32>
    %14 = vector.shape_cast %13 : vector<2x8x8x16xf32> to vector<128x16xf32>
    %c0_21 = arith.constant 0 : index
    %c48 = arith.constant 48 : index
    %15 = vector.load %arg4[%c0_21, %c48] : memref<128x144xf32, #tpu.memory_space<vmem>>, vector<128x16xf32>
    tpu.vector_store %arg4[%c0_21, %c48], %14 {strides = array<i32>} : memref<128x144xf32, #tpu.memory_space<vmem>>, vector<128x16xf32>,
    %c0_22 = arith.constant 0 : index
    %c0_23 = arith.constant 0 : index
    %c1_24 = arith.constant 1 : index
    %c1_25 = arith.constant 1 : index
    %c0_26 = arith.constant 0 : index
    %16 = vector.load %arg1[%c0_22, %c0_23, %c1_24, %c1_25, %c0_26] : memref<1x2x10x10x16xf32, #tpu.memory_space<vmem>>, vector<1x2x8x8x16xf32>
    %17 = vector.shape_cast %16 : vector<1x2x8x8x16xf32> to vector<2x8x8x16xf32>
    %18 = vector.shape_cast %17 : vector<2x8x8x16xf32> to vector<128x16xf32>
    %c0_27 = arith.constant 0 : index
    %c64 = arith.constant 64 : index
    %19 = vector.load %arg4[%c0_27, %c64] : memref<128x144xf32, #tpu.memory_space<vmem>>, vector<128x16xf32>
    tpu.vector_store %arg4[%c0_27, %c64], %18 {strides = array<i32>} : memref<128x144xf32, #tpu.memory_space<vmem>>, vector<128x16xf32>,
    %c0_28 = arith.constant 0 : index
    %c0_29 = arith.constant 0 : index
    %c1_30 = arith.constant 1 : index
    %c2_31 = arith.constant 2 : index
    %c0_32 = arith.constant 0 : index
    %20 = vector.load %arg1[%c0_28, %c0_29, %c1_30, %c2_31, %c0_32] : memref<1x2x10x10x16xf32, #tpu.memory_space<vmem>>, vector<1x2x8x8x16xf32>
    %21 = vector.shape_cast %20 : vector<1x2x8x8x16xf32> to vector<2x8x8x16xf32>
    %22 = vector.shape_cast %21 : vector<2x8x8x16xf32> to vector<128x16xf32>
    %c0_33 = arith.constant 0 : index
    %c80 = arith.constant 80 : index
    %23 = vector.load %arg4[%c0_33, %c80] : memref<128x144xf32, #tpu.memory_space<vmem>>, vector<128x16xf32>
    tpu.vector_store %arg4[%c0_33, %c80], %22 {strides = array<i32>} : memref<128x144xf32, #tpu.memory_space<vmem>>, vector<128x16xf32>,
    %c0_34 = arith.constant 0 : index
    %c0_35 = arith.constant 0 : index
    %c2_36 = arith.constant 2 : index
    %c0_37 = arith.constant 0 : index
    %c0_38 = arith.constant 0 : index
    %24 = vector.load %arg1[%c0_34, %c0_35, %c2_36, %c0_37, %c0_38] : memref<1x2x10x10x16xf32, #tpu.memory_space<vmem>>, vector<1x2x8x8x16xf32>
    %25 = vector.shape_cast %24 : vector<1x2x8x8x16xf32> to vector<2x8x8x16xf32>
    %26 = vector.shape_cast %25 : vector<2x8x8x16xf32> to vector<128x16xf32>
    %c0_39 = arith.constant 0 : index
    %c96 = arith.constant 96 : index
    %27 = vector.load %arg4[%c0_39, %c96] : memref<128x144xf32, #tpu.memory_space<vmem>>, vector<128x16xf32>
    tpu.vector_store %arg4[%c0_39, %c96], %26 {strides = array<i32>} : memref<128x144xf32, #tpu.memory_space<vmem>>, vector<128x16xf32>,
    %c0_40 = arith.constant 0 : index
    %c0_41 = arith.constant 0 : index
    %c2_42 = arith.constant 2 : index
    %c1_43 = arith.constant 1 : index
    %c0_44 = arith.constant 0 : index
    %28 = vector.load %arg1[%c0_40, %c0_41, %c2_42, %c1_43, %c0_44] : memref<1x2x10x10x16xf32, #tpu.memory_space<vmem>>, vector<1x2x8x8x16xf32>
    %29 = vector.shape_cast %28 : vector<1x2x8x8x16xf32> to vector<2x8x8x16xf32>
    %30 = vector.shape_cast %29 : vector<2x8x8x16xf32> to vector<128x16xf32>
    %c0_45 = arith.constant 0 : index
    %c112 = arith.constant 112 : index
    %31 = vector.load %arg4[%c0_45, %c112] : memref<128x144xf32, #tpu.memory_space<vmem>>, vector<128x16xf32>
    tpu.vector_store %arg4[%c0_45, %c112], %30 {strides = array<i32>} : memref<128x144xf32, #tpu.memory_space<vmem>>, vector<128x16xf32>,
    %c0_46 = arith.constant 0 : index
    %c0_47 = arith.constant 0 : index
    %c2_48 = arith.constant 2 : index
    %c2_49 = arith.constant 2 : index
    %c0_50 = arith.constant 0 : index
    %32 = vector.load %arg1[%c0_46, %c0_47, %c2_48, %c2_49, %c0_50] : memref<1x2x10x10x16xf32, #tpu.memory_space<vmem>>, vector<1x2x8x8x16xf32>
    %33 = vector.shape_cast %32 : vector<1x2x8x8x16xf32> to vector<2x8x8x16xf32>
    %34 = vector.shape_cast %33 : vector<2x8x8x16xf32> to vector<128x16xf32>
    %c0_51 = arith.constant 0 : index
    %c128 = arith.constant 128 : index
    %35 = vector.load %arg4[%c0_51, %c128] : memref<128x144xf32, #tpu.memory_space<vmem>>, vector<128x16xf32>
    tpu.vector_store %arg4[%c0_51, %c128], %34 {strides = array<i32>} : memref<128x144xf32, #tpu.memory_space<vmem>>, vector<128x16xf32>,
    %c0_52 = arith.constant 0 : index
    %c0_53 = arith.constant 0 : index
    %36 = vector.load %arg4[%c0_52, %c0_53] : memref<128x144xf32, #tpu.memory_space<vmem>>, vector<128x144xf32>
    %37 = arith.truncf %36 : vector<128x144xf32> to vector<128x144xbf16>
    %c0_54 = arith.constant 0 : index
    %c0_55 = arith.constant 0 : index
    %c0_56 = arith.constant 0 : index
    %38 = vector.load %arg2[%c0_54, %c0_55, %c0_56] : memref<1x16x144xbf16, #tpu.memory_space<vmem>>, vector<1x16x144xbf16>
    %39 = vector.shape_cast %38 : vector<1x16x144xbf16> to vector<16x144xbf16>
    %cst = arith.constant dense<0.000000e+00> : vector<16x128xf32>
    %40 = tpu.matmul %39, %37, %cst {dimension_numbers = #tpu.dot_dimension_numbers<[1], [1], [0], [0], [0, 0, 1, 0], [], []>} : vector<16x144xbf16>, vector<128x144xbf16>, vector<16x128xf32> -> vector<16x128xf32>
    %c0_57 = arith.constant 0 : index
    %c0_58 = arith.constant 0 : index
    %c0_59 = arith.constant 0 : index
    %41 = vector.load %arg3[%c0_57, %c0_58, %c0_59] : memref<1x16x128xf32, #tpu.memory_space<vmem>>, vector<1x16x128xf32>
    %42 = vector.shape_cast %41 : vector<1x16x128xf32> to vector<16x128xf32>
    %43 = vector.shape_cast %40 : vector<16x128xf32> to vector<1x16x128xf32>
    tpu.vector_store %arg3[%c0_57, %c0_58, %c0_59], %43 {strides = array<i32>} : memref<1x16x128xf32, #tpu.memory_space<vmem>>, vector<1x16x128xf32>,
    return
  }
  func.func @transform_0(%arg0: i32) -> (i32, i32, i32, i32, i32) {
    %c0_i32 = arith.constant 0 : i32
    %c0_i32_0 = arith.constant 0 : i32
    %c0_i32_1 = arith.constant 0 : i32
    %c0_i32_2 = arith.constant 0 : i32
    %c0_i32_3 = arith.constant 0 : i32
    return %arg0, %c0_i32, %c0_i32_0, %c0_i32_1, %c0_i32_2 : i32, i32, i32, i32, i32
  }
  func.func @transform_1(%arg0: i32) -> (i32, i32, i32) {
    %c0_i32 = arith.constant 0 : i32
    %c0_i32_0 = arith.constant 0 : i32
    %c0_i32_1 = arith.constant 0 : i32
    return %arg0, %c0_i32, %c0_i32_0 : i32, i32, i32
  }
  func.func @transform_2(%arg0: i32) -> (i32, i32, i32) {
    %c0_i32 = arith.constant 0 : i32
    %c0_i32_0 = arith.constant 0 : i32
    %c0_i32_1 = arith.constant 0 : i32
    return %arg0, %c0_i32, %c0_i32_0 : i32, i32, i32
  }
}

</mosaic_0001>

<llo_original>
// kernel: tpu_custom_call.1
$region0: #{tpu_custom_call.1}
  #allocation0 [shape = 'u32[]', space=smem, size = 0x4, offset = 0x4, fixed_abs, tag = 'smem constant byte address 0x4 - core index']
  #allocation1 [shape = 'u32[144,128]{1,0:T(1,128)}', space=vmem, size = 0x12000, scoped, tag = 'internal scratch']
  #allocation2 [shape = 'f32[128,144]{1,0:T(8,128)}', space=vmem, size = 0x20000, scoped, tag = 'scratch operand']
  %s0 = inlined_call_operand.vmem [shape: f32[5,2,10,10,16], index: 0, kind: input, shape index: {}]
  %s1 = inlined_call_operand.vmem [shape: bf16[5,16,144], index: 1, kind: input, shape index: {}]
  %s2 = inlined_call_operand.hbm [shape: f32[5,16,128], index: 2, kind: output, shape index: {}]
  %s3 = sld [smem:[#allocation0]]
  $region41: #{tpu_custom_call.1} parent=0
    _
  %s5 = ssub.s32 1, %s3
  %s6 = scalar_select 0, %s5, %s3
  $region1: #{tpu_custom_call.1} parent=0
    #allocation3 [shape = 'u8[16384]{0}', space=vmem, size = 0x4000, scoped, tag = 'output window, operand 0']
    #allocation4 [shape = 's32[2]{0}', space=sflag, size = 0x8, scoped, tag = 'scoped memory for tpu_custom_call.1']
    %7 = vsyncpa [#allocation4], 0
    %s8 = scalar_lea.sflag [#allocation4], 1
    %9 = vsyncpa %s8, 0
    loop: start=0, step=1, limit=7
    $region2: #{tpu_custom_call.1} parent=1 // loop_pre_header
      _
    $region3: #{tpu_custom_call.1} parent=1 // loop_header
      %s11 = sphi 0, %s15
      %p12 = scmp.ge.s32.totalorder %s11, 7
      %s21 = sphi 0, %s23
      %s24 = sphi 0, %s21
      %s25 = sphi 0, %s24
      %s41 = sphi 0, %s25
      %s47 = sphi 0, %s49
      %s50 = sphi 0, %s47
      %s51 = sphi 0, %s50
      %s67 = sphi 0, %s51
      %s73 = sphi 0, %s75
      %s76 = sphi 0, %s73
      %s77 = sphi 0, %s76
      %s93 = sphi 0, %s77
    $region4: #{tpu_custom_call.1} parent=1 // loop_header_branch
      %14 = sbr.rel (%p12) target = $region8
    $region5: #{tpu_custom_call.1} parent=1 // loop_body
      %s16 = ssub.s32 %s11, 1
      %s17 = ssub.s32 %s11, 2
      %s18 = sadd.s32 %s11, 1
      %s19 = ssub.s32 %s11, %s18
      %p20 = scmp.eq.s32.totalorder %s19, 0
      %s22 = sadd.s32 %s21, 1
      %s23 = scalar_select %p20, %s21, %s22
      %p26 = pneg %p20
      %p27 = scmp.eq.s32.totalorder %s11, 4
      %p28 = por %p26, %p27
      %p29 = scmp.ne.s32.totalorder %s21, %s24
      %p30 = scmp.eq.s32.totalorder %s11, 0
      %p31 = por %p29, %p30
      %p32 = scmp.ne.s32.totalorder %s21, %s24
      %p33 = scmp.eq.s32.totalorder %s16, 4
      %p34 = por %p32, %p33
      %p35 = scmp.ne.s32.totalorder %s24, %s25
      %p36 = scmp.eq.s32.totalorder %s16, 0
      %p37 = por %p35, %p36
      %p38 = scmp.ne.s32.totalorder %s24, %s25
      %p39 = scmp.eq.s32.totalorder %s17, 4
      %p40 = por %p38, %p39
      %p42 = scmp.ne.s32.totalorder %s25, %s41
      %p43 = scmp.eq.s32.totalorder %s17, 0
      %p44 = por %p42, %p43
      %s45 = ssub.s32 %s11, %s18
      %p46 = scmp.eq.s32.totalorder %s45, 0
      %s48 = sadd.s32 %s47, 1
      %s49 = scalar_select %p46, %s47, %s48
      %p52 = pneg %p46
      %p53 = scmp.eq.s32.totalorder %s11, 4
      %p54 = por %p52, %p53
      %p55 = scmp.ne.s32.totalorder %s47, %s50
      %p56 = scmp.eq.s32.totalorder %s11, 0
      %p57 = por %p55, %p56
      %p58 = scmp.ne.s32.totalorder %s47, %s50
      %p59 = scmp.eq.s32.totalorder %s16, 4
      %p60 = por %p58, %p59
      %p61 = scmp.ne.s32.totalorder %s50, %s51
      %p62 = scmp.eq.s32.totalorder %s16, 0
      %p63 = por %p61, %p62
      %p64 = scmp.ne.s32.totalorder %s50, %s51
      %p65 = scmp.eq.s32.totalorder %s17, 4
      %p66 = por %p64, %p65
      %p68 = scmp.ne.s32.totalorder %s51, %s67
      %p69 = scmp.eq.s32.totalorder %s17, 0
      %p70 = por %p68, %p69
      %s71 = ssub.s32 %s11, %s18
      %p72 = scmp.eq.s32.totalorder %s71, 0
      %s74 = sadd.s32 %s73, 1
      %s75 = scalar_select %p72, %s73, %s74
      %p78 = pneg %p72
      %p79 = scmp.eq.s32.totalorder %s11, 4
      %p80 = por %p78, %p79
      %p81 = scmp.ne.s32.totalorder %s73, %s76
      %p82 = scmp.eq.s32.totalorder %s11, 0
      %p83 = por %p81, %p82
      %p84 = scmp.ne.s32.totalorder %s73, %s76
      %p85 = scmp.eq.s32.totalorder %s16, 4
      %p86 = por %p84, %p85
      %p87 = scmp.ne.s32.totalorder %s76, %s77
      %p88 = scmp.eq.s32.totalorder %s16, 0
      %p89 = por %p87, %p88
      %p90 = scmp.ne.s32.totalorder %s76, %s77
      %p91 = scmp.eq.s32.totalorder %s17, 4
      %p92 = por %p90, %p91
      %p94 = scmp.ne.s32.totalorder %s77, %s93
      %p95 = scmp.eq.s32.totalorder %s17, 0
      %p96 = por %p94, %p95
      %p97 = scmp.le.s32.totalorder 1, %s11
      %p98 = scmp.lt.s32.totalorder %s11, 6
      %p99 = pnand %p97, %p98
      %p100 = pneg %p99
      // Predicated region
      $region9: #{tpu_custom_call.1} parent=5 // pred_check
        _
      $region10: #{tpu_custom_call.1} parent=5 // pred_check_branch
        %102 = sbr.rel (%p99) target = $region12
      $region11: #{tpu_custom_call.1} parent=5 // pred_region
        %s103 = ssub.s32 %s11, 1
      $region12: #{tpu_custom_call.1} parent=5 // pred_fallthru
        _
      %p104 = scmp.lt.s32.totalorder %s11, 5
      // Predicated region
      $region13: #{tpu_custom_call.1} parent=5 // pred_check
        %p105 = pneg %p104
      $region14: #{tpu_custom_call.1} parent=5 // pred_check_branch
        %107 = sbr.rel (%p105) target = $region16
      $region15: #{tpu_custom_call.1} parent=5 // pred_region
        // Predicated region
        $region17: #{tpu_custom_call.1} parent=15 // pred_check
          %p108 = pneg %p31
        $region18: #{tpu_custom_call.1} parent=15 // pred_check_branch
          %110 = sbr.rel (%p108) target = $region20
        $region19: #{tpu_custom_call.1} parent=15 // pred_region
          %p111 = scmp.lt.s32.totalorder %s11, 4
          %s112 = scalar_select %p111, %s11, 4
          %s113 = smul.addr %s112, 40
          %s114 = smul.addr %s113, 8
          %s115 = scalar_lea.vmem %s0, %s114
        $region20: #{tpu_custom_call.1} parent=15 // pred_fallthru
          _
        // Predicated region
        $region21: #{tpu_custom_call.1} parent=15 // pred_check
          %p116 = pneg %p57
        $region22: #{tpu_custom_call.1} parent=15 // pred_check_branch
          %118 = sbr.rel (%p116) target = $region24
        $region23: #{tpu_custom_call.1} parent=15 // pred_region
          %p119 = scmp.lt.s32.totalorder %s11, 4
          %s120 = scalar_select %p119, %s11, 4
          %s121 = smul.addr %s120, 4
          %s122 = smul.addr %s121, 4
          %s123 = scalar_lea.vmem %s1, %s122
        $region24: #{tpu_custom_call.1} parent=15 // pred_fallthru
          _
      $region16: #{tpu_custom_call.1} parent=5 // pred_fallthru
        _
      %p124 = scmp.le.s32.totalorder 1, %s11
      %p125 = scmp.lt.s32.totalorder %s11, 6
      %p126 = pnand %p124, %p125
      %p127 = pneg %p126
      // Predicated region
      $region25: #{tpu_custom_call.1} parent=5 // pred_check
        _
      $region26: #{tpu_custom_call.1} parent=5 // pred_check_branch
        %129 = sbr.rel (%p126) target = $region28
      $region27: #{tpu_custom_call.1} parent=5 // pred_region
        %s130 = ssub.s32 %s11, 1
        %p131 = scmp.lt.s32.totalorder %s16, 4
        %s132 = scalar_select %p131, %s16, 4
        %s133 = smul.addr %s132, 40
        %s134 = smul.addr %s133, 8
        %s135 = scalar_lea.vmem %s0, %s134
        %p136 = pneg %p37
        %p137 = pneg %p34
        %p138 = scmp.lt.s32.totalorder %s16, 4
        %s139 = scalar_select %p138, %s16, 4
        %s140 = smul.addr %s139, 4
        %s141 = smul.addr %s140, 4
        %s142 = scalar_lea.vmem %s1, %s141
        %p143 = pneg %p63
        %p144 = pneg %p60
        %p145 = pneg %p89
        %p146 = pneg %p86
        %s147 = sand.u32 %s76, 1
        %s148 = scalar_lea.sflag [#allocation4], %s147
        %s149 = sand.u32 %s76, 1
        %s150 = smul.addr %s149, 16
        %s151 = scalar_lea.vmem [#allocation3], %s150
        %p152 = scmp.lt.s32.totalorder %s16, 4
        %s153 = scalar_select %p152, %s16, 4
        %s154 = smul.addr %s153, 40
        %s155 = smul.addr %s154, 8
        %s156 = scalar_lea.vmem %s0, %s155
        %p157 = scmp.lt.s32.totalorder %s16, 4
        %s158 = scalar_select %p157, %s16, 4
        %s159 = smul.addr %s158, 4
        %s160 = smul.addr %s159, 4
        %s161 = scalar_lea.vmem %s1, %s160
        %v163 = vld [vmem:[%s156] sm:$0xff]
        %v164 = vld [vmem:[%s156 + $0x10] sm:$0xff]
        %v165 = vld [vmem:[%s156 + $0x20] sm:$0xff]
        %v166 = vld [vmem:[%s156 + $0x30] sm:$0xff]
        %v167 = vld [vmem:[%s156 + $0x40] sm:$0xff]
        %v168 = vld [vmem:[%s156 + $0x50] sm:$0xff]
        %v169 = vld [vmem:[%s156 + $0x60] sm:$0xff]
        %v170 = vld [vmem:[%s156 + $0x70] sm:$0xff]
        %v171 = vld [vmem:[%s156 + $0xa0] sm:$0xff]
        %v172 = vld [vmem:[%s156 + $0xb0] sm:$0xff]
        %v173 = vld [vmem:[%s156 + $0xc0] sm:$0xff]
        %v174 = vld [vmem:[%s156 + $0xd0] sm:$0xff]
        %v175 = vld [vmem:[%s156 + $0xe0] sm:$0xff]
        %v176 = vld [vmem:[%s156 + $0xf0] sm:$0xff]
        %v177 = vld [vmem:[%s156 + $0x100] sm:$0xff]
        %v178 = vld [vmem:[%s156 + $0x110] sm:$0xff]
        %vm179 = vcmask 130048
        %180 = vst.msk [vmem:[#allocation2] sm:$0xff] %vm179, %v163
        %181 = vst.msk [vmem:[#allocation2 + $0x10] sm:$0xff] %vm179, %v164
        %182 = vst.msk [vmem:[#allocation2 + $0x20] sm:$0xff] %vm179, %v165
        %183 = vst.msk [vmem:[#allocation2 + $0x30] sm:$0xff] %vm179, %v166
        %184 = vst.msk [vmem:[#allocation2 + $0x40] sm:$0xff] %vm179, %v167
        %185 = vst.msk [vmem:[#allocation2 + $0x50] sm:$0xff] %vm179, %v168
        %186 = vst.msk [vmem:[#allocation2 + $0x60] sm:$0xff] %vm179, %v169
        %187 = vst.msk [vmem:[#allocation2 + $0x70] sm:$0xff] %vm179, %v170
        %188 = vst.msk [vmem:[#allocation2 + $0x80] sm:$0xff] %vm179, %v171
        %189 = vst.msk [vmem:[#allocation2 + $0x90] sm:$0xff] %vm179, %v172
        %190 = vst.msk [vmem:[#allocation2 + $0xa0] sm:$0xff] %vm179, %v173
        %191 = vst.msk [vmem:[#allocation2 + $0xb0] sm:$0xff] %vm179, %v174
        %192 = vst.msk [vmem:[#allocation2 + $0xc0] sm:$0xff] %vm179, %v175
        %193 = vst.msk [vmem:[#allocation2 + $0xd0] sm:$0xff] %vm179, %v176
        %194 = vst.msk [vmem:[#allocation2 + $0xe0] sm:$0xff] %vm179, %v177
        %195 = vst.msk [vmem:[#allocation2 + $0xf0] sm:$0xff] %vm179, %v178
        %v196 = vld [vmem:[%s156 + $0x1] sm:$0xff]
        %v197 = vld [vmem:[%s156 + $0x11] sm:$0xff]
        %v198 = vld [vmem:[%s156 + $0x21] sm:$0xff]
        %v199 = vld [vmem:[%s156 + $0x31] sm:$0xff]
        %v200 = vld [vmem:[%s156 + $0x41] sm:$0xff]
        %v201 = vld [vmem:[%s156 + $0x51] sm:$0xff]
        %v202 = vld [vmem:[%s156 + $0x61] sm:$0xff]
        %v203 = vld [vmem:[%s156 + $0x71] sm:$0xff]
        %v204 = vld [vmem:[%s156 + $0xa1] sm:$0xff]
        %v205 = vld [vmem:[%s156 + $0xb1] sm:$0xff]
        %v206 = vld [vmem:[%s156 + $0xc1] sm:$0xff]
        %v207 = vld [vmem:[%s156 + $0xd1] sm:$0xff]
        %v208 = vld [vmem:[%s156 + $0xe1] sm:$0xff]
        %v209 = vld [vmem:[%s156 + $0xf1] sm:$0xff]
        %v210 = vld [vmem:[%s156 + $0x101] sm:$0xff]
        %v211 = vld [vmem:[%s156 + $0x111] sm:$0xff]
        %228 = vrot.lane.b32.xlu0 %v196, 16
        %v229 = vpop.permute.xlu0 %228
        %230 = vrot.lane.b32.xlu0 %v197, 16
        %v231 = vpop.permute.xlu0 %230
        %232 = vrot.lane.b32.xlu0 %v198, 16
        %v233 = vpop.permute.xlu0 %232
        %234 = vrot.lane.b32.xlu0 %v199, 16
        %v235 = vpop.permute.xlu0 %234
        %236 = vrot.lane.b32.xlu0 %v200, 16
        %v237 = vpop.permute.xlu0 %236
        %238 = vrot.lane.b32.xlu0 %v201, 16
        %v239 = vpop.permute.xlu0 %238
        %240 = vrot.lane.b32.xlu0 %v202, 16
        %v241 = vpop.permute.xlu0 %240
        %242 = vrot.lane.b32.xlu0 %v203, 16
        %v243 = vpop.permute.xlu0 %242
        %244 = vrot.lane.b32.xlu0 %v204, 16
        %v245 = vpop.permute.xlu0 %244
        %246 = vrot.lane.b32.xlu0 %v205, 16
        %v247 = vpop.permute.xlu0 %246
        %248 = vrot.lane.b32.xlu0 %v206, 16
        %v249 = vpop.permute.xlu0 %248
        %250 = vrot.lane.b32.xlu0 %v207, 16
        %v251 = vpop.permute.xlu0 %250
        %252 = vrot.lane.b32.xlu0 %v208, 16
        %v253 = vpop.permute.xlu0 %252
        %254 = vrot.lane.b32.xlu0 %v209, 16
        %v255 = vpop.permute.xlu0 %254
        %256 = vrot.lane.b32.xlu0 %v210, 16
        %v257 = vpop.permute.xlu0 %256
        %258 = vrot.lane.b32.xlu0 %v211, 16
        %v259 = vpop.permute.xlu0 %258
        %vm276 = vcmask 261248
        %277 = vst.msk [vmem:[#allocation2] sm:$0xff] %vm276, %v229
        %278 = vst.msk [vmem:[#allocation2 + $0x10] sm:$0xff] %vm276, %v231
        %279 = vst.msk [vmem:[#allocation2 + $0x20] sm:$0xff] %vm276, %v233
        %280 = vst.msk [vmem:[#allocation2 + $0x30] sm:$0xff] %vm276, %v235
        %281 = vst.msk [vmem:[#allocation2 + $0x40] sm:$0xff] %vm276, %v237
        %282 = vst.msk [vmem:[#allocation2 + $0x50] sm:$0xff] %vm276, %v239
        %283 = vst.msk [vmem:[#allocation2 + $0x60] sm:$0xff] %vm276, %v241
        %284 = vst.msk [vmem:[#allocation2 + $0x70] sm:$0xff] %vm276, %v243
        %285 = vst.msk [vmem:[#allocation2 + $0x80] sm:$0xff] %vm276, %v245
        %286 = vst.msk [vmem:[#allocation2 + $0x90] sm:$0xff] %vm276, %v247
        %287 = vst.msk [vmem:[#allocation2 + $0xa0] sm:$0xff] %vm276, %v249
        %288 = vst.msk [vmem:[#allocation2 + $0xb0] sm:$0xff] %vm276, %v251
        %289 = vst.msk [vmem:[#allocation2 + $0xc0] sm:$0xff] %vm276, %v253
        %290 = vst.msk [vmem:[#allocation2 + $0xd0] sm:$0xff] %vm276, %v255
        %291 = vst.msk [vmem:[#allocation2 + $0xe0] sm:$0xff] %vm276, %v257
        %292 = vst.msk [vmem:[#allocation2 + $0xf0] sm:$0xff] %vm276, %v259
        %v293 = vld [vmem:[%s156 + $0x2] sm:$0xff]
        %v294 = vld [vmem:[%s156 + $0x12] sm:$0xff]
        %v295 = vld [vmem:[%s156 + $0x22] sm:$0xff]
        %v296 = vld [vmem:[%s156 + $0x32] sm:$0xff]
        %v297 = vld [vmem:[%s156 + $0x42] sm:$0xff]
        %v298 = vld [vmem:[%s156 + $0x52] sm:$0xff]
        %v299 = vld [vmem:[%s156 + $0x62] sm:$0xff]
        %v300 = vld [vmem:[%s156 + $0x72] sm:$0xff]
        %v301 = vld [vmem:[%s156 + $0xa2] sm:$0xff]
        %v302 = vld [vmem:[%s156 + $0xb2] sm:$0xff]
        %v303 = vld [vmem:[%s156 + $0xc2] sm:$0xff]
        %v304 = vld [vmem:[%s156 + $0xd2] sm:$0xff]
        %v305 = vld [vmem:[%s156 + $0xe2] sm:$0xff]
        %v306 = vld [vmem:[%s156 + $0xf2] sm:$0xff]
        %v307 = vld [vmem:[%s156 + $0x102] sm:$0xff]
        %v308 = vld [vmem:[%s156 + $0x112] sm:$0xff]
        %325 = vrot.lane.b32.xlu0 %v293, 32
        %v326 = vpop.permute.xlu0 %325
        %327 = vrot.lane.b32.xlu0 %v294, 32
        %v328 = vpop.permute.xlu0 %327
        %329 = vrot.lane.b32.xlu0 %v295, 32
        %v330 = vpop.permute.xlu0 %329
        %331 = vrot.lane.b32.xlu0 %v296, 32
        %v332 = vpop.permute.xlu0 %331
        %333 = vrot.lane.b32.xlu0 %v297, 32
        %v334 = vpop.permute.xlu0 %333
        %335 = vrot.lane.b32.xlu0 %v298, 32
        %v336 = vpop.permute.xlu0 %335
        %337 = vrot.lane.b32.xlu0 %v299, 32
        %v338 = vpop.permute.xlu0 %337
        %339 = vrot.lane.b32.xlu0 %v300, 32
        %v340 = vpop.permute.xlu0 %339
        %341 = vrot.lane.b32.xlu0 %v301, 32
        %v342 = vpop.permute.xlu0 %341
        %343 = vrot.lane.b32.xlu0 %v302, 32
        %v344 = vpop.permute.xlu0 %343
        %345 = vrot.lane.b32.xlu0 %v303, 32
        %v346 = vpop.permute.xlu0 %345
        %347 = vrot.lane.b32.xlu0 %v304, 32
        %v348 = vpop.permute.xlu0 %347
        %349 = vrot.lane.b32.xlu0 %v305, 32
        %v350 = vpop.permute.xlu0 %349
        %351 = vrot.lane.b32.xlu0 %v306, 32
        %v352 = vpop.permute.xlu0 %351
        %353 = vrot.lane.b32.xlu0 %v307, 32
        %v354 = vpop.permute.xlu0 %353
        %355 = vrot.lane.b32.xlu0 %v308, 32
        %v356 = vpop.permute.xlu0 %355
        %vm373 = vcmask 392448
        %374 = vst.msk [vmem:[#allocation2] sm:$0xff] %vm373, %v326
        %375 = vst.msk [vmem:[#allocation2 + $0x10] sm:$0xff] %vm373, %v328
        %376 = vst.msk [vmem:[#allocation2 + $0x20] sm:$0xff] %vm373, %v330
        %377 = vst.msk [vmem:[#allocation2 + $0x30] sm:$0xff] %vm373, %v332
        %378 = vst.msk [vmem:[#allocation2 + $0x40] sm:$0xff] %vm373, %v334
        %379 = vst.msk [vmem:[#allocation2 + $0x50] sm:$0xff] %vm373, %v336
        %380 = vst.msk [vmem:[#allocation2 + $0x60] sm:$0xff] %vm373, %v338
        %381 = vst.msk [vmem:[#allocation2 + $0x70] sm:$0xff] %vm373, %v340
        %382 = vst.msk [vmem:[#allocation2 + $0x80] sm:$0xff] %vm373, %v342
        %383 = vst.msk [vmem:[#allocation2 + $0x90] sm:$0xff] %vm373, %v344
        %384 = vst.msk [vmem:[#allocation2 + $0xa0] sm:$0xff] %vm373, %v346
        %385 = vst.msk [vmem:[#allocation2 + $0xb0] sm:$0xff] %vm373, %v348
        %386 = vst.msk [vmem:[#allocation2 + $0xc0] sm:$0xff] %vm373, %v350
        %387 = vst.msk [vmem:[#allocation2 + $0xd0] sm:$0xff] %vm373, %v352
        %388 = vst.msk [vmem:[#allocation2 + $0xe0] sm:$0xff] %vm373, %v354
        %389 = vst.msk [vmem:[#allocation2 + $0xf0] sm:$0xff] %vm373, %v356
        %s390 = scalar_lea.vmem %s156, 16
        %v391 = vld [vmem:[%s390] sm:$0xff]
        %v392 = vld [vmem:[%s390 + $0x10] sm:$0xff]
        %v393 = vld [vmem:[%s390 + $0x20] sm:$0xff]
        %v394 = vld [vmem:[%s390 + $0x30] sm:$0xff]
        %v395 = vld [vmem:[%s390 + $0x40] sm:$0xff]
        %v396 = vld [vmem:[%s390 + $0x50] sm:$0xff]
        %v397 = vld [vmem:[%s390 + $0x60] sm:$0xff]
        %v398 = vld [vmem:[%s390 + $0x70] sm:$0xff]
        %v399 = vld [vmem:[%s390 + $0xa0] sm:$0xff]
        %v400 = vld [vmem:[%s390 + $0xb0] sm:$0xff]
        %v401 = vld [vmem:[%s390 + $0xc0] sm:$0xff]
        %v402 = vld [vmem:[%s390 + $0xd0] sm:$0xff]
        %v403 = vld [vmem:[%s390 + $0xe0] sm:$0xff]
        %v404 = vld [vmem:[%s390 + $0xf0] sm:$0xff]
        %v405 = vld [vmem:[%s390 + $0x100] sm:$0xff]
        %v406 = vld [vmem:[%s390 + $0x110] sm:$0xff]
        %423 = vrot.lane.b32.xlu0 %v391, 48
        %v424 = vpop.permute.xlu0 %423
        %425 = vrot.lane.b32.xlu0 %v392, 48
        %v426 = vpop.permute.xlu0 %425
        %427 = vrot.lane.b32.xlu0 %v393, 48
        %v428 = vpop.permute.xlu0 %427
        %429 = vrot.lane.b32.xlu0 %v394, 48
        %v430 = vpop.permute.xlu0 %429
        %431 = vrot.lane.b32.xlu0 %v395, 48
        %v432 = vpop.permute.xlu0 %431
        %433 = vrot.lane.b32.xlu0 %v396, 48
        %v434 = vpop.permute.xlu0 %433
        %435 = vrot.lane.b32.xlu0 %v397, 48
        %v436 = vpop.permute.xlu0 %435
        %437 = vrot.lane.b32.xlu0 %v398, 48
        %v438 = vpop.permute.xlu0 %437
        %439 = vrot.lane.b32.xlu0 %v399, 48
        %v440 = vpop.permute.xlu0 %439
        %441 = vrot.lane.b32.xlu0 %v400, 48
        %v442 = vpop.permute.xlu0 %441
        %443 = vrot.lane.b32.xlu0 %v401, 48
        %v444 = vpop.permute.xlu0 %443
        %445 = vrot.lane.b32.xlu0 %v402, 48
        %v446 = vpop.permute.xlu0 %445
        %447 = vrot.lane.b32.xlu0 %v403, 48
        %v448 = vpop.permute.xlu0 %447
        %449 = vrot.lane.b32.xlu0 %v404, 48
        %v450 = vpop.permute.xlu0 %449
        %451 = vrot.lane.b32.xlu0 %v405, 48
        %v452 = vpop.permute.xlu0 %451
        %453 = vrot.lane.b32.xlu0 %v406, 48
        %v454 = vpop.permute.xlu0 %453
        %vm471 = vcmask 523648
        %472 = vst.msk [vmem:[#allocation2] sm:$0xff] %vm471, %v424
        %473 = vst.msk [vmem:[#allocation2 + $0x10] sm:$0xff] %vm471, %v426
        %474 = vst.msk [vmem:[#allocation2 + $0x20] sm:$0xff] %vm471, %v428
        %475 = vst.msk [vmem:[#allocation2 + $0x30] sm:$0xff] %vm471, %v430
        %476 = vst.msk [vmem:[#allocation2 + $0x40] sm:$0xff] %vm471, %v432
        %477 = vst.msk [vmem:[#allocation2 + $0x50] sm:$0xff] %vm471, %v434
        %478 = vst.msk [vmem:[#allocation2 + $0x60] sm:$0xff] %vm471, %v436
        %479 = vst.msk [vmem:[#allocation2 + $0x70] sm:$0xff] %vm471, %v438
        %480 = vst.msk [vmem:[#allocation2 + $0x80] sm:$0xff] %vm471, %v440
        %481 = vst.msk [vmem:[#allocation2 + $0x90] sm:$0xff] %vm471, %v442
        %482 = vst.msk [vmem:[#allocation2 + $0xa0] sm:$0xff] %vm471, %v444
        %483 = vst.msk [vmem:[#allocation2 + $0xb0] sm:$0xff] %vm471, %v446
        %484 = vst.msk [vmem:[#allocation2 + $0xc0] sm:$0xff] %vm471, %v448
        %485 = vst.msk [vmem:[#allocation2 + $0xd0] sm:$0xff] %vm471, %v450
        %486 = vst.msk [vmem:[#allocation2 + $0xe0] sm:$0xff] %vm471, %v452
        %487 = vst.msk [vmem:[#allocation2 + $0xf0] sm:$0xff] %vm471, %v454
        %v488 = vld [vmem:[%s390 + $0x1] sm:$0xff]
        %v489 = vld [vmem:[%s390 + $0x11] sm:$0xff]
        %v490 = vld [vmem:[%s390 + $0x21] sm:$0xff]
        %v491 = vld [vmem:[%s390 + $0x31] sm:$0xff]
        %v492 = vld [vmem:[%s390 + $0x41] sm:$0xff]
        %v493 = vld [vmem:[%s390 + $0x51] sm:$0xff]
        %v494 = vld [vmem:[%s390 + $0x61] sm:$0xff]
        %v495 = vld [vmem:[%s390 + $0x71] sm:$0xff]
        %v496 = vld [vmem:[%s390 + $0xa1] sm:$0xff]
        %v497 = vld [vmem:[%s390 + $0xb1] sm:$0xff]
        %v498 = vld [vmem:[%s390 + $0xc1] sm:$0xff]
        %v499 = vld [vmem:[%s390 + $0xd1] sm:$0xff]
        %v500 = vld [vmem:[%s390 + $0xe1] sm:$0xff]
        %v501 = vld [vmem:[%s390 + $0xf1] sm:$0xff]
        %v502 = vld [vmem:[%s390 + $0x101] sm:$0xff]
        %v503 = vld [vmem:[%s390 + $0x111] sm:$0xff]
        %520 = vrot.lane.b32.xlu0 %v488, 64
        %v521 = vpop.permute.xlu0 %520
        %522 = vrot.lane.b32.xlu0 %v489, 64
        %v523 = vpop.permute.xlu0 %522
        %524 = vrot.lane.b32.xlu0 %v490, 64
        %v525 = vpop.permute.xlu0 %524
        %526 = vrot.lane.b32.xlu0 %v491, 64
        %v527 = vpop.permute.xlu0 %526
        %528 = vrot.lane.b32.xlu0 %v492, 64
        %v529 = vpop.permute.xlu0 %528
        %530 = vrot.lane.b32.xlu0 %v493, 64
        %v531 = vpop.permute.xlu0 %530
        %532 = vrot.lane.b32.xlu0 %v494, 64
        %v533 = vpop.permute.xlu0 %532
        %534 = vrot.lane.b32.xlu0 %v495, 64
        %v535 = vpop.permute.xlu0 %534
        %536 = vrot.lane.b32.xlu0 %v496, 64
        %v537 = vpop.permute.xlu0 %536
        %538 = vrot.lane.b32.xlu0 %v497, 64
        %v539 = vpop.permute.xlu0 %538
        %540 = vrot.lane.b32.xlu0 %v498, 64
        %v541 = vpop.permute.xlu0 %540
        %542 = vrot.lane.b32.xlu0 %v499, 64
        %v543 = vpop.permute.xlu0 %542
        %544 = vrot.lane.b32.xlu0 %v500, 64
        %v545 = vpop.permute.xlu0 %544
        %546 = vrot.lane.b32.xlu0 %v501, 64
        %v547 = vpop.permute.xlu0 %546
        %548 = vrot.lane.b32.xlu0 %v502, 64
        %v549 = vpop.permute.xlu0 %548
        %550 = vrot.lane.b32.xlu0 %v503, 64
        %v551 = vpop.permute.xlu0 %550
        %vm568 = vcmask 654848
        %569 = vst.msk [vmem:[#allocation2] sm:$0xff] %vm568, %v521
        %570 = vst.msk [vmem:[#allocation2 + $0x10] sm:$0xff] %vm568, %v523
        %571 = vst.msk [vmem:[#allocation2 + $0x20] sm:$0xff] %vm568, %v525
        %572 = vst.msk [vmem:[#allocation2 + $0x30] sm:$0xff] %vm568, %v527
        %573 = vst.msk [vmem:[#allocation2 + $0x40] sm:$0xff] %vm568, %v529
        %574 = vst.msk [vmem:[#allocation2 + $0x50] sm:$0xff] %vm568, %v531
        %575 = vst.msk [vmem:[#allocation2 + $0x60] sm:$0xff] %vm568, %v533
        %576 = vst.msk [vmem:[#allocation2 + $0x70] sm:$0xff] %vm568, %v535
        %577 = vst.msk [vmem:[#allocation2 + $0x80] sm:$0xff] %vm568, %v537
        %578 = vst.msk [vmem:[#allocation2 + $0x90] sm:$0xff] %vm568, %v539
        %579 = vst.msk [vmem:[#allocation2 + $0xa0] sm:$0xff] %vm568, %v541
        %580 = vst.msk [vmem:[#allocation2 + $0xb0] sm:$0xff] %vm568, %v543
        %581 = vst.msk [vmem:[#allocation2 + $0xc0] sm:$0xff] %vm568, %v545
        %582 = vst.msk [vmem:[#allocation2 + $0xd0] sm:$0xff] %vm568, %v547
        %583 = vst.msk [vmem:[#allocation2 + $0xe0] sm:$0xff] %vm568, %v549
        %584 = vst.msk [vmem:[#allocation2 + $0xf0] sm:$0xff] %vm568, %v551
        %v585 = vld [vmem:[%s390 + $0x2] sm:$0xff]
        %v586 = vld [vmem:[%s390 + $0x12] sm:$0xff]
        %v587 = vld [vmem:[%s390 + $0x22] sm:$0xff]
        %v588 = vld [vmem:[%s390 + $0x32] sm:$0xff]
        %v589 = vld [vmem:[%s390 + $0x42] sm:$0xff]
        %v590 = vld [vmem:[%s390 + $0x52] sm:$0xff]
        %v591 = vld [vmem:[%s390 + $0x62] sm:$0xff]
        %v592 = vld [vmem:[%s390 + $0x72] sm:$0xff]
        %v593 = vld [vmem:[%s390 + $0xa2] sm:$0xff]
        %v594 = vld [vmem:[%s390 + $0xb2] sm:$0xff]
        %v595 = vld [vmem:[%s390 + $0xc2] sm:$0xff]
        %v596 = vld [vmem:[%s390 + $0xd2] sm:$0xff]
        %v597 = vld [vmem:[%s390 + $0xe2] sm:$0xff]
        %v598 = vld [vmem:[%s390 + $0xf2] sm:$0xff]
        %v599 = vld [vmem:[%s390 + $0x102] sm:$0xff]
        %v600 = vld [vmem:[%s390 + $0x112] sm:$0xff]
        %617 = vrot.lane.b32.xlu0 %v585, 80
        %v618 = vpop.permute.xlu0 %617
        %619 = vrot.lane.b32.xlu0 %v586, 80
        %v620 = vpop.permute.xlu0 %619
        %621 = vrot.lane.b32.xlu0 %v587, 80
        %v622 = vpop.permute.xlu0 %621
        %623 = vrot.lane.b32.xlu0 %v588, 80
        %v624 = vpop.permute.xlu0 %623
        %625 = vrot.lane.b32.xlu0 %v589, 80
        %v626 = vpop.permute.xlu0 %625
        %627 = vrot.lane.b32.xlu0 %v590, 80
        %v628 = vpop.permute.xlu0 %627
        %629 = vrot.lane.b32.xlu0 %v591, 80
        %v630 = vpop.permute.xlu0 %629
        %631 = vrot.lane.b32.xlu0 %v592, 80
        %v632 = vpop.permute.xlu0 %631
        %633 = vrot.lane.b32.xlu0 %v593, 80
        %v634 = vpop.permute.xlu0 %633
        %635 = vrot.lane.b32.xlu0 %v594, 80
        %v636 = vpop.permute.xlu0 %635
        %637 = vrot.lane.b32.xlu0 %v595, 80
        %v638 = vpop.permute.xlu0 %637
        %639 = vrot.lane.b32.xlu0 %v596, 80
        %v640 = vpop.permute.xlu0 %639
        %641 = vrot.lane.b32.xlu0 %v597, 80
        %v642 = vpop.permute.xlu0 %641
        %643 = vrot.lane.b32.xlu0 %v598, 80
        %v644 = vpop.permute.xlu0 %643
        %645 = vrot.lane.b32.xlu0 %v599, 80
        %v646 = vpop.permute.xlu0 %645
        %647 = vrot.lane.b32.xlu0 %v600, 80
        %v648 = vpop.permute.xlu0 %647
        %vm665 = vcmask 786048
        %666 = vst.msk [vmem:[#allocation2] sm:$0xff] %vm665, %v618
        %667 = vst.msk [vmem:[#allocation2 + $0x10] sm:$0xff] %vm665, %v620
        %668 = vst.msk [vmem:[#allocation2 + $0x20] sm:$0xff] %vm665, %v622
        %669 = vst.msk [vmem:[#allocation2 + $0x30] sm:$0xff] %vm665, %v624
        %670 = vst.msk [vmem:[#allocation2 + $0x40] sm:$0xff] %vm665, %v626
        %671 = vst.msk [vmem:[#allocation2 + $0x50] sm:$0xff] %vm665, %v628
        %672 = vst.msk [vmem:[#allocation2 + $0x60] sm:$0xff] %vm665, %v630
        %673 = vst.msk [vmem:[#allocation2 + $0x70] sm:$0xff] %vm665, %v632
        %674 = vst.msk [vmem:[#allocation2 + $0x80] sm:$0xff] %vm665, %v634
        %675 = vst.msk [vmem:[#allocation2 + $0x90] sm:$0xff] %vm665, %v636
        %676 = vst.msk [vmem:[#allocation2 + $0xa0] sm:$0xff] %vm665, %v638
        %677 = vst.msk [vmem:[#allocation2 + $0xb0] sm:$0xff] %vm665, %v640
        %678 = vst.msk [vmem:[#allocation2 + $0xc0] sm:$0xff] %vm665, %v642
        %679 = vst.msk [vmem:[#allocation2 + $0xd0] sm:$0xff] %vm665, %v644
        %680 = vst.msk [vmem:[#allocation2 + $0xe0] sm:$0xff] %vm665, %v646
        %681 = vst.msk [vmem:[#allocation2 + $0xf0] sm:$0xff] %vm665, %v648
        %s682 = scalar_lea.vmem %s156, 32
        %v683 = vld [vmem:[%s682] sm:$0xff]
        %v684 = vld [vmem:[%s682 + $0x10] sm:$0xff]
        %v685 = vld [vmem:[%s682 + $0x20] sm:$0xff]
        %v686 = vld [vmem:[%s682 + $0x30] sm:$0xff]
        %v687 = vld [vmem:[%s682 + $0x40] sm:$0xff]
        %v688 = vld [vmem:[%s682 + $0x50] sm:$0xff]
        %v689 = vld [vmem:[%s682 + $0x60] sm:$0xff]
        %v690 = vld [vmem:[%s682 + $0x70] sm:$0xff]
        %v691 = vld [vmem:[%s682 + $0xa0] sm:$0xff]
        %v692 = vld [vmem:[%s682 + $0xb0] sm:$0xff]
        %v693 = vld [vmem:[%s682 + $0xc0] sm:$0xff]
        %v694 = vld [vmem:[%s682 + $0xd0] sm:$0xff]
        %v695 = vld [vmem:[%s682 + $0xe0] sm:$0xff]
        %v696 = vld [vmem:[%s682 + $0xf0] sm:$0xff]
        %v697 = vld [vmem:[%s682 + $0x100] sm:$0xff]
        %v698 = vld [vmem:[%s682 + $0x110] sm:$0xff]
        %715 = vrot.lane.b32.xlu0 %v683, 96
        %v716 = vpop.permute.xlu0 %715
        %717 = vrot.lane.b32.xlu0 %v684, 96
        %v718 = vpop.permute.xlu0 %717
        %719 = vrot.lane.b32.xlu0 %v685, 96
        %v720 = vpop.permute.xlu0 %719
        %721 = vrot.lane.b32.xlu0 %v686, 96
        %v722 = vpop.permute.xlu0 %721
        %723 = vrot.lane.b32.xlu0 %v687, 96
        %v724 = vpop.permute.xlu0 %723
        %725 = vrot.lane.b32.xlu0 %v688, 96
        %v726 = vpop.permute.xlu0 %725
        %727 = vrot.lane.b32.xlu0 %v689, 96
        %v728 = vpop.permute.xlu0 %727
        %729 = vrot.lane.b32.xlu0 %v690, 96
        %v730 = vpop.permute.xlu0 %729
        %731 = vrot.lane.b32.xlu0 %v691, 96
        %v732 = vpop.permute.xlu0 %731
        %733 = vrot.lane.b32.xlu0 %v692, 96
        %v734 = vpop.permute.xlu0 %733
        %735 = vrot.lane.b32.xlu0 %v693, 96
        %v736 = vpop.permute.xlu0 %735
        %737 = vrot.lane.b32.xlu0 %v694, 96
        %v738 = vpop.permute.xlu0 %737
        %739 = vrot.lane.b32.xlu0 %v695, 96
        %v740 = vpop.permute.xlu0 %739
        %741 = vrot.lane.b32.xlu0 %v696, 96
        %v742 = vpop.permute.xlu0 %741
        %743 = vrot.lane.b32.xlu0 %v697, 96
        %v744 = vpop.permute.xlu0 %743
        %745 = vrot.lane.b32.xlu0 %v698, 96
        %v746 = vpop.permute.xlu0 %745
        %vm763 = vcmask 917248
        %764 = vst.msk [vmem:[#allocation2] sm:$0xff] %vm763, %v716
        %765 = vst.msk [vmem:[#allocation2 + $0x10] sm:$0xff] %vm763, %v718
        %766 = vst.msk [vmem:[#allocation2 + $0x20] sm:$0xff] %vm763, %v720
        %767 = vst.msk [vmem:[#allocation2 + $0x30] sm:$0xff] %vm763, %v722
        %768 = vst.msk [vmem:[#allocation2 + $0x40] sm:$0xff] %vm763, %v724
        %769 = vst.msk [vmem:[#allocation2 + $0x50] sm:$0xff] %vm763, %v726
        %770 = vst.msk [vmem:[#allocation2 + $0x60] sm:$0xff] %vm763, %v728
        %771 = vst.msk [vmem:[#allocation2 + $0x70] sm:$0xff] %vm763, %v730
        %772 = vst.msk [vmem:[#allocation2 + $0x80] sm:$0xff] %vm763, %v732
        %773 = vst.msk [vmem:[#allocation2 + $0x90] sm:$0xff] %vm763, %v734
        %774 = vst.msk [vmem:[#allocation2 + $0xa0] sm:$0xff] %vm763, %v736
        %775 = vst.msk [vmem:[#allocation2 + $0xb0] sm:$0xff] %vm763, %v738
        %776 = vst.msk [vmem:[#allocation2 + $0xc0] sm:$0xff] %vm763, %v740
        %777 = vst.msk [vmem:[#allocation2 + $0xd0] sm:$0xff] %vm763, %v742
        %778 = vst.msk [vmem:[#allocation2 + $0xe0] sm:$0xff] %vm763, %v744
        %779 = vst.msk [vmem:[#allocation2 + $0xf0] sm:$0xff] %vm763, %v746
        %v780 = vld [vmem:[%s682 + $0x1] sm:$0xff]
        %v781 = vld [vmem:[%s682 + $0x11] sm:$0xff]
        %v782 = vld [vmem:[%s682 + $0x21] sm:$0xff]
        %v783 = vld [vmem:[%s682 + $0x31] sm:$0xff]
        %v784 = vld [vmem:[%s682 + $0x41] sm:$0xff]
        %v785 = vld [vmem:[%s682 + $0x51] sm:$0xff]
        %v786 = vld [vmem:[%s682 + $0x61] sm:$0xff]
        %v787 = vld [vmem:[%s682 + $0x71] sm:$0xff]
        %v788 = vld [vmem:[%s682 + $0xa1] sm:$0xff]
        %v789 = vld [vmem:[%s682 + $0xb1] sm:$0xff]
        %v790 = vld [vmem:[%s682 + $0xc1] sm:$0xff]
        %v791 = vld [vmem:[%s682 + $0xd1] sm:$0xff]
        %v792 = vld [vmem:[%s682 + $0xe1] sm:$0xff]
        %v793 = vld [vmem:[%s682 + $0xf1] sm:$0xff]
        %v794 = vld [vmem:[%s682 + $0x101] sm:$0xff]
        %v795 = vld [vmem:[%s682 + $0x111] sm:$0xff]
        %812 = vrot.lane.b32.xlu0 %v780, 112
        %v813 = vpop.permute.xlu0 %812
        %814 = vrot.lane.b32.xlu0 %v781, 112
        %v815 = vpop.permute.xlu0 %814
        %816 = vrot.lane.b32.xlu0 %v782, 112
        %v817 = vpop.permute.xlu0 %816
        %818 = vrot.lane.b32.xlu0 %v783, 112
        %v819 = vpop.permute.xlu0 %818
        %820 = vrot.lane.b32.xlu0 %v784, 112
        %v821 = vpop.permute.xlu0 %820
        %822 = vrot.lane.b32.xlu0 %v785, 112
        %v823 = vpop.permute.xlu0 %822
        %824 = vrot.lane.b32.xlu0 %v786, 112
        %v825 = vpop.permute.xlu0 %824
        %826 = vrot.lane.b32.xlu0 %v787, 112
        %v827 = vpop.permute.xlu0 %826
        %828 = vrot.lane.b32.xlu0 %v788, 112
        %v829 = vpop.permute.xlu0 %828
        %830 = vrot.lane.b32.xlu0 %v789, 112
        %v831 = vpop.permute.xlu0 %830
        %832 = vrot.lane.b32.xlu0 %v790, 112
        %v833 = vpop.permute.xlu0 %832
        %834 = vrot.lane.b32.xlu0 %v791, 112
        %v835 = vpop.permute.xlu0 %834
        %836 = vrot.lane.b32.xlu0 %v792, 112
        %v837 = vpop.permute.xlu0 %836
        %838 = vrot.lane.b32.xlu0 %v793, 112
        %v839 = vpop.permute.xlu0 %838
        %840 = vrot.lane.b32.xlu0 %v794, 112
        %v841 = vpop.permute.xlu0 %840
        %842 = vrot.lane.b32.xlu0 %v795, 112
        %v843 = vpop.permute.xlu0 %842
        %vm860 = vcmask 1048448
        %861 = vst.msk [vmem:[#allocation2] sm:$0xff] %vm860, %v813
        %862 = vst.msk [vmem:[#allocation2 + $0x10] sm:$0xff] %vm860, %v815
        %863 = vst.msk [vmem:[#allocation2 + $0x20] sm:$0xff] %vm860, %v817
        %864 = vst.msk [vmem:[#allocation2 + $0x30] sm:$0xff] %vm860, %v819
        %865 = vst.msk [vmem:[#allocation2 + $0x40] sm:$0xff] %vm860, %v821
        %866 = vst.msk [vmem:[#allocation2 + $0x50] sm:$0xff] %vm860, %v823
        %867 = vst.msk [vmem:[#allocation2 + $0x60] sm:$0xff] %vm860, %v825
        %868 = vst.msk [vmem:[#allocation2 + $0x70] sm:$0xff] %vm860, %v827
        %869 = vst.msk [vmem:[#allocation2 + $0x80] sm:$0xff] %vm860, %v829
        %870 = vst.msk [vmem:[#allocation2 + $0x90] sm:$0xff] %vm860, %v831
        %871 = vst.msk [vmem:[#allocation2 + $0xa0] sm:$0xff] %vm860, %v833
        %872 = vst.msk [vmem:[#allocation2 + $0xb0] sm:$0xff] %vm860, %v835
        %873 = vst.msk [vmem:[#allocation2 + $0xc0] sm:$0xff] %vm860, %v837
        %874 = vst.msk [vmem:[#allocation2 + $0xd0] sm:$0xff] %vm860, %v839
        %875 = vst.msk [vmem:[#allocation2 + $0xe0] sm:$0xff] %vm860, %v841
        %876 = vst.msk [vmem:[#allocation2 + $0xf0] sm:$0xff] %vm860, %v843
        %v877 = vld [vmem:[%s682 + $0x2] sm:$0xff]
        %v878 = vld [vmem:[%s682 + $0x12] sm:$0xff]
        %v879 = vld [vmem:[%s682 + $0x22] sm:$0xff]
        %v880 = vld [vmem:[%s682 + $0x32] sm:$0xff]
        %v881 = vld [vmem:[%s682 + $0x42] sm:$0xff]
        %v882 = vld [vmem:[%s682 + $0x52] sm:$0xff]
        %v883 = vld [vmem:[%s682 + $0x62] sm:$0xff]
        %v884 = vld [vmem:[%s682 + $0x72] sm:$0xff]
        %v885 = vld [vmem:[%s682 + $0xa2] sm:$0xff]
        %v886 = vld [vmem:[%s682 + $0xb2] sm:$0xff]
        %v887 = vld [vmem:[%s682 + $0xc2] sm:$0xff]
        %v888 = vld [vmem:[%s682 + $0xd2] sm:$0xff]
        %v889 = vld [vmem:[%s682 + $0xe2] sm:$0xff]
        %v890 = vld [vmem:[%s682 + $0xf2] sm:$0xff]
        %v891 = vld [vmem:[%s682 + $0x102] sm:$0xff]
        %v892 = vld [vmem:[%s682 + $0x112] sm:$0xff]
        %893 = vst.msk [vmem:[#allocation2 + $0x8] sm:$0xff] %vm179, %v877
        %894 = vst.msk [vmem:[#allocation2 + $0x18] sm:$0xff] %vm179, %v878
        %895 = vst.msk [vmem:[#allocation2 + $0x28] sm:$0xff] %vm179, %v879
        %896 = vst.msk [vmem:[#allocation2 + $0x38] sm:$0xff] %vm179, %v880
        %897 = vst.msk [vmem:[#allocation2 + $0x48] sm:$0xff] %vm179, %v881
        %898 = vst.msk [vmem:[#allocation2 + $0x58] sm:$0xff] %vm179, %v882
        %899 = vst.msk [vmem:[#allocation2 + $0x68] sm:$0xff] %vm179, %v883
        %900 = vst.msk [vmem:[#allocation2 + $0x78] sm:$0xff] %vm179, %v884
        %901 = vst.msk [vmem:[#allocation2 + $0x88] sm:$0xff] %vm179, %v885
        %902 = vst.msk [vmem:[#allocation2 + $0x98] sm:$0xff] %vm179, %v886
        %903 = vst.msk [vmem:[#allocation2 + $0xa8] sm:$0xff] %vm179, %v887
        %904 = vst.msk [vmem:[#allocation2 + $0xb8] sm:$0xff] %vm179, %v888
        %905 = vst.msk [vmem:[#allocation2 + $0xc8] sm:$0xff] %vm179, %v889
        %906 = vst.msk [vmem:[#allocation2 + $0xd8] sm:$0xff] %vm179, %v890
        %907 = vst.msk [vmem:[#allocation2 + $0xe8] sm:$0xff] %vm179, %v891
        %908 = vst.msk [vmem:[#allocation2 + $0xf8] sm:$0xff] %vm179, %v892
        %v909 = vld [vmem:[#allocation2] sm:$0xff]
        %v910 = vld [vmem:[#allocation2 + $0x8] sm:$0xff]
        %v911 = vld [vmem:[#allocation2 + $0x10] sm:$0xff]
        %v912 = vld [vmem:[#allocation2 + $0x18] sm:$0xff]
        %v913 = vld [vmem:[#allocation2 + $0x20] sm:$0xff]
        %v914 = vld [vmem:[#allocation2 + $0x28] sm:$0xff]
        %v915 = vld [vmem:[#allocation2 + $0x30] sm:$0xff]
        %v916 = vld [vmem:[#allocation2 + $0x38] sm:$0xff]
        %v917 = vld [vmem:[#allocation2 + $0x40] sm:$0xff]
        %v918 = vld [vmem:[#allocation2 + $0x48] sm:$0xff]
        %v919 = vld [vmem:[#allocation2 + $0x50] sm:$0xff]
        %v920 = vld [vmem:[#allocation2 + $0x58] sm:$0xff]
        %v921 = vld [vmem:[#allocation2 + $0x60] sm:$0xff]
        %v922 = vld [vmem:[#allocation2 + $0x68] sm:$0xff]
        %v923 = vld [vmem:[#allocation2 + $0x70] sm:$0xff]
        %v924 = vld [vmem:[#allocation2 + $0x78] sm:$0xff]
        %v925 = vld [vmem:[#allocation2 + $0x80] sm:$0xff]
        %v926 = vld [vmem:[#allocation2 + $0x88] sm:$0xff]
        %v927 = vld [vmem:[#allocation2 + $0x90] sm:$0xff]
        %v928 = vld [vmem:[#allocation2 + $0x98] sm:$0xff]
        %v929 = vld [vmem:[#allocation2 + $0xa0] sm:$0xff]
        %v930 = vld [vmem:[#allocation2 + $0xa8] sm:$0xff]
        %v931 = vld [vmem:[#allocation2 + $0xb0] sm:$0xff]
        %v932 = vld [vmem:[#allocation2 + $0xb8] sm:$0xff]
        %v933 = vld [vmem:[#allocation2 + $0xc0] sm:$0xff]
        %v934 = vld [vmem:[#allocation2 + $0xc8] sm:$0xff]
        %v935 = vld [vmem:[#allocation2 + $0xd0] sm:$0xff]
        %v936 = vld [vmem:[#allocation2 + $0xd8] sm:$0xff]
        %v937 = vld [vmem:[#allocation2 + $0xe0] sm:$0xff]
        %v938 = vld [vmem:[#allocation2 + $0xe8] sm:$0xff]
        %v939 = vld [vmem:[#allocation2 + $0xf0] sm:$0xff]
        %v940 = vld [vmem:[#allocation2 + $0xf8] sm:$0xff]
        %v941 = vpack.c.bf16 %v911, %v909
        %v942 = vpack.c.bf16 %v912, %v910
        %v943 = vpack.c.bf16 %v915, %v913
        %v944 = vpack.c.bf16 %v916, %v914
        %v945 = vpack.c.bf16 %v919, %v917
        %v946 = vpack.c.bf16 %v920, %v918
        %v947 = vpack.c.bf16 %v923, %v921
        %v948 = vpack.c.bf16 %v924, %v922
        %v949 = vpack.c.bf16 %v927, %v925
        %v950 = vpack.c.bf16 %v928, %v926
        %v951 = vpack.c.bf16 %v931, %v929
        %v952 = vpack.c.bf16 %v932, %v930
        %v953 = vpack.c.bf16 %v935, %v933
        %v954 = vpack.c.bf16 %v936, %v934
        %v955 = vpack.c.bf16 %v939, %v937
        %v956 = vpack.c.bf16 %v940, %v938
        %v957 = vld [vmem:[%s161] sm:$0xff]
        %v958 = vld [vmem:[%s161 + $0x8] sm:$0xff]
        %v961 = vunpack.c.l.b16 %v957
        %v962 = vunpack.c.h.b16 %v957
        %v963 = vunpack.c.l.b16 %v958
        %v964 = vunpack.c.h.b16 %v958
        %v965 = vpack.c.b16 %v963, %v961
        %v966 = vpack.c.b16 %v964, %v962
        %v969 = vsel %vm179, %v966, 0
        %v972 = vsel %vm179, %v942, 0
        %v975 = vsel %vm179, %v944, 0
        %v978 = vsel %vm179, %v946, 0
        %v981 = vsel %vm179, %v948, 0
        %v984 = vsel %vm179, %v950, 0
        %v987 = vsel %vm179, %v952, 0
        %v990 = vsel %vm179, %v954, 0
        %v993 = vsel %vm179, %v956, 0
        %995 = vmatprep.subr.bf16.mxu0 %v972
        %996 = vmatpush1.bf16.xpose.msra.mxu0 %v941
        %997 = vmatprep.subr.bf16.mxu0 %v975
        %998 = vmatpush1.bf16.xpose.msra.mxu0 %v943
        %999 = vmatprep.subr.bf16.mxu0 %v978
        %1000 = vmatpush1.bf16.xpose.msra.mxu0 %v945
        %1001 = vmatprep.subr.bf16.mxu0 %v981
        %1002 = vmatpush1.bf16.xpose.msra.mxu0 %v947
        %1003 = vmatprep.subr.bf16.mxu0 %v984
        %1004 = vmatpush1.bf16.xpose.msra.mxu0 %v949
        %1005 = vmatprep.subr.bf16.mxu0 %v987
        %1006 = vmatpush1.bf16.xpose.msra.mxu0 %v951
        %1007 = vmatprep.subr.bf16.mxu0 %v990
        %1008 = vmatpush1.bf16.xpose.msra.mxu0 %v953
        %1009 = vmatprep.subr.bf16.mxu0 %v993
        %1010 = vmatpush1.bf16.xpose.msra.mxu0 %v955
        %1011 = vmatprep.subr.bf16.mxu0 0
        %1012 = vmatpush1.bf16.xpose.msra.mxu0 0
        %1013 = vmatprep.subr.bf16.mxu0 0
        %1014 = vmatpush1.bf16.xpose.msra.mxu0 0
        %1015 = vmatprep.subr.bf16.mxu0 0
        %1016 = vmatpush1.bf16.xpose.msra.mxu0 0
        %1017 = vmatprep.subr.bf16.mxu0 0
        %1018 = vmatpush1.bf16.xpose.msra.mxu0 0
        %1019 = vmatprep.subr.bf16.mxu0 0
        %1020 = vmatpush1.bf16.xpose.msra.mxu0 0
        %1021 = vmatprep.subr.bf16.mxu0 0
        %1022 = vmatpush1.bf16.xpose.msra.mxu0 0
        %1023 = vmatprep.subr.bf16.mxu0 0
        %1024 = vmatpush1.bf16.xpose.msra.mxu0 0
        %1025 = vmatprep.subr.bf16.mxu0 0
        %1026 = vmatpush1.bf16.xpose.msra.mxu0 0
        %1027 = vmatprep.mubr.bf16.mxu0 %v969
        %1028 = vmatmul.mubr.bf16.gmra.mrb[0].mxu0 %v965
        %v1029 = vpop.f32.mrb[0].mxu0
        %v1030 = vadd.f32 0.0, %v1029
        %v1031 = vpop.f32.mrb[0].mxu0
        %v1032 = vpop.f32.mrb[0].mxu0
        %v1033 = vadd.f32 0.0, %v1032
        %v1034 = vpop.f32.mrb[0].mxu0
        %1035 = vdwg.mxu0
        %1036 = vst [vmem:[%s151] sm:$0xff] %v1030
        %1037 = vst [vmem:[%s151 + $0x8] sm:$0xff] %v1033
        %s1038 = sand.u32 %s76, 1
        %s1039 = scalar_lea.sflag [#allocation4], %s1038
        %s1040 = sand.u32 %s76, 1
        %s1041 = smul.addr %s1040, 16
        %s1042 = scalar_lea.vmem [#allocation3], %s1041
        // Predicated region
        $region29: #{tpu_custom_call.1} parent=27 // pred_check
          %p1043 = pneg %p86
        $region30: #{tpu_custom_call.1} parent=27 // pred_check_branch
          %1045 = sbr.rel (%p1043) target = $region32
        $region31: #{tpu_custom_call.1} parent=27 // pred_region
          %s1047 = ssub.s32 256, 256
          %1048 = vsyncadd %s1039, %s1047
          %s1049 = smul.addr %s16, 2
          %s1050 = smul.addr %s1049, 128
          %s1051 = scalar_lea.hbm %s2, %s1050
          %s1052 = sshll.u32 %s1042, 4
          %s1053 = int_to_ptr.vmem [resolvable:$true] %s1052
          %1058 = dma.vmem_to_hbm [thread:$0]  %s1053, 256, %s1051, %s1039, 128, 128, 8
        $region32: #{tpu_custom_call.1} parent=27 // pred_fallthru
          _
      $region28: #{tpu_custom_call.1} parent=5 // pred_fallthru
        _
      %p1059 = scmp.le.s32.totalorder 2, %s11
      // Predicated region
      $region33: #{tpu_custom_call.1} parent=5 // pred_check
        %p1060 = pneg %p1059
      $region34: #{tpu_custom_call.1} parent=5 // pred_check_branch
        %1062 = sbr.rel (%p1060) target = $region36
      $region35: #{tpu_custom_call.1} parent=5 // pred_region
        %s1063 = ssub.s32 %s11, 2
        // Predicated region
        $region37: #{tpu_custom_call.1} parent=35 // pred_check
          %p1064 = pneg %p92
        $region38: #{tpu_custom_call.1} parent=35 // pred_check_branch
          %1066 = sbr.rel (%p1064) target = $region40
        $region39: #{tpu_custom_call.1} parent=35 // pred_region
          %s1067 = sand.u32 %s77, 1
          %s1068 = scalar_lea.sflag [#allocation4], %s1067
          %s1069 = sand.u32 %s77, 1
          %s1070 = smul.addr %s1069, 16
          %s1071 = scalar_lea.vmem [#allocation3], %s1070
          %1072 = dma.done %s1068, 256
        $region40: #{tpu_custom_call.1} parent=35 // pred_fallthru
          _
      $region36: #{tpu_custom_call.1} parent=5 // pred_fallthru
        _
    $region6: #{tpu_custom_call.1} parent=1 // loop_footer
      %s15 = sadd.s32 1, %s11
    $region7: #{tpu_custom_call.1} parent=1 // loop_footer_branch
      %10 = sbr.rel target = $region3
    $region8: #{tpu_custom_call.1} parent=1 // loop_exit
      _
    %1073 = vsyncpa [#allocation4], 1
    %s1074 = scalar_lea.sflag [#allocation4], 1
    %1075 = vsyncpa %s1074, 1

</llo_original>
